<compile_context>
chip_gen: v7x
topology: tpu7x:2x2x1
jax: 0.10.0
libtpu: 0.0.40
codegen_flags: <defaults>
</compile_context>

<pallas_src>
import functools

import jax
import jax.numpy as jnp
from jax.experimental import pallas as pl
from jax.experimental.pallas import tpu as pltpu

MARGIN = 0.5
EPS = 1e-12            # matches torch.nn.functional.normalize default eps
_LANES = 128
_SUBLANES = 8
_CHUNK_LANES = 512     # lane-chunk width for the in-kernel reduction loop
_MAX_BLOCK_ROWS = 16384


# ----------------------------------------------------------------------------
# Kernel
# ----------------------------------------------------------------------------
def _partial_sums(a, p, n):
    """Five per-row reductions in f32: Σa², Σp², Σn², Σa·p, Σa·n.

    Products are done in the inputs' native dtype (bf16 stays packed 2/lane on
    the v6e/v7x VPU, halving mul-slot pressure); only the reduction accumulates
    in f32.  For f32 inputs this is exact and introduces no extra copies.
    """
    def rs(x, y):
        return jnp.sum((x * y).astype(jnp.float32), axis=1, keepdims=True)

    return rs(a, a), rs(p, p), rs(n, n), rs(a, p), rs(a, n)


def _triplet_loss_kernel(a_ref, p_ref, n_ref, o_ref, *, batch_size):
    tb, d = a_ref.shape  # block shape (static)

    # --- Row reductions, chunked over lanes so only a (tb, chunk) working set
    # is live at any time (no whole-tile f32 upcast copies of a/p/n). ---------
    if d <= _CHUNK_LANES:
        saa, spp, snn, sap, san = _partial_sums(
            a_ref[...], p_ref[...], n_ref[...])
    else:
        n_full = d // _CHUNK_LANES
        rem = d % _CHUNK_LANES

        def body(c, carry):
            off = pl.multiple_of(c * _CHUNK_LANES, _CHUNK_LANES)
            part = _partial_sums(a_ref[:, pl.ds(off, _CHUNK_LANES)],
                                 p_ref[:, pl.ds(off, _CHUNK_LANES)],
                                 n_ref[:, pl.ds(off, _CHUNK_LANES)])
            return tuple(x + y for x, y in zip(carry, part))

        zero = jnp.zeros((tb, 1), jnp.float32)
        acc = jax.lax.fori_loop(0, n_full, body, (zero,) * 5,
                                unroll=(n_full <= 8))
        if rem:
            off = n_full * _CHUNK_LANES  # static tail offset
            part = _partial_sums(a_ref[:, pl.ds(off, rem)],
                                 p_ref[:, pl.ds(off, rem)],
                                 n_ref[:, pl.ds(off, rem)])
            acc = tuple(x + y for x, y in zip(acc, part))
        saa, spp, snn, sap, san = acc

    # 1 / max(||x||, eps) == rsqrt(max(Σx², eps²))  (sqrt is monotone) -> EUP.
    inv_a = jax.lax.rsqrt(jnp.maximum(saa, EPS * EPS))
    inv_p = jax.lax.rsqrt(jnp.maximum(spp, EPS * EPS))
    inv_n = jax.lax.rsqrt(jnp.maximum(snn, EPS * EPS))

    # ||x̂||² (== 1 except for near-zero rows, matching torch semantics).
    na2 = saa * (inv_a * inv_a)
    np2 = spp * (inv_p * inv_p)
    nn2 = snn * (inv_n * inv_n)

    # ||â - p̂||² = ||â||² + ||p̂||² - 2·â·p̂  (likewise for n); clamp at 0 since
    # the reference's sum of squares is >= 0 and the rewrite can cancel to -1e-7.
    pos_dist = jnp.maximum(na2 + np2 - 2.0 * sap * (inv_a * inv_p), 0.0)
    neg_dist = jnp.maximum(na2 + nn2 - 2.0 * san * (inv_a * inv_n), 0.0)

    loss = jnp.maximum(pos_dist - neg_dist + MARGIN, 0.0)   # (tb, 1) f32

    def store(block_sum):
        # Full (1, 8, 128) vreg-aligned tile -> unmasked vst, clean 4 KiB DMA.
        o_ref[...] = jnp.broadcast_to(block_sum, o_ref.shape).astype(jnp.float32)

    rem_rows = batch_size % tb  # static Python int
    if rem_rows == 0:
        # Every block is full: no masking anywhere.
        store(jnp.sum(loss))
    else:
        # Mask padded rows only on the last block; every other step stays clean.
        last = pl.num_programs(0) - 1

        @pl.when(pl.program_id(0) != last)
        def _():
            store(jnp.sum(loss))

        @pl.when(pl.program_id(0) == last)
        def _():
            rows = jax.lax.broadcasted_iota(jnp.int32, (tb, 1), 0)
            store(jnp.sum(jnp.where(rows < rem_rows, loss, 0.0)))


# ----------------------------------------------------------------------------
# Wrapper
# ----------------------------------------------------------------------------
def _is_v7x():
    try:
        kind = jax.devices()[0].device_kind.lower()
    except Exception:
        return False
    return "v7" in kind


def _vmem_limit_bytes():
    """Generation-aware scoped-VMEM limit (physical: 128 MiB v5e/v6e, 64 MiB v7x)."""
    phys = 64 * 1024 * 1024  # conservative fallback (v7x per-TC physical)
    try:
        info = pltpu.get_tpu_info()
        phys = int(getattr(info, "vmem_capacity_bytes", phys)) or phys
    except Exception:
        pass
    # Leave headroom for compiler scratch: 3/4 of physical, capped at 96 MiB.
    # -> v5e/v6e: 96 MiB, v7x: 48 MiB.
    return min((phys * 3) // 4, 96 * 1024 * 1024)


def _pick_block_rows(d, itemsize, budget_bytes, num_buffers):
    """Size the batch tile by BYTES against the same budget handed to Mosaic."""
    chunk = min(d, _CHUNK_LANES)
    # Per-row VMEM bytes resident per grid step:
    #   pipelined inputs     : 3 arrays x num_buffers x D x itemsize
    #   reduce-chunk temps   : ~3 live (rows, chunk) f32 values
    #   row-wise f32 scalars : ~8 live (rows, 1) values (budgeted lane-padded)
    bytes_per_row = (3 * num_buffers * d * itemsize
                     + 3 * chunk * 4
                     + 8 * _LANES * 4)
    tb = int(min(budget_bytes // bytes_per_row, _MAX_BLOCK_ROWS))
    return max(_SUBLANES, (tb // _SUBLANES) * _SUBLANES)


def triplet_loss(anchor, positive, negative, *, block_rows=None,
                 input_buffers=2, core_parallel=None):
    """anchor/positive/negative: (B, D) float arrays -> scalar f32 mean loss.

    Pass bf16 activations straight through (halves HBM traffic); the kernel
    upcasts in-register.  Do NOT astype to f32 in the caller.
    `input_buffers=3` deepens input pipelining (useful on v5e if per-step DMA
    is still exposed after the larger tiles).
    """
    B, D = anchor.shape
    assert positive.shape == (B, D) and negative.shape == (B, D)

    itemsize = jnp.dtype(anchor.dtype).itemsize
    vmem_limit = _vmem_limit_bytes()
    if block_rows is None:
        # Byte-sized tiles derived from the same generation-aware budget we
        # hand the compiler (85% of the scoped limit, 15% headroom).
        block_rows = _pick_block_rows(D, itemsize, (vmem_limit * 85) // 100,
                                      input_buffers)

    if B <= block_rows:
        tb = B                                   # full-extent block is legal
    else:
        tb = max(_SUBLANES, (block_rows // _SUBLANES) * _SUBLANES)

    num_blocks = pl.cdiv(B, tb)
    kernel = functools.partial(_triplet_loss_kernel, batch_size=B)

    def make_in_spec():
        if input_buffers == 2:
            return pl.BlockSpec((tb, D), lambda b: (b, 0))
        return pl.BlockSpec((tb, D), lambda b: (b, 0),
                            pipeline_mode=pl.Buffered(input_buffers))

    if core_parallel is None:
        core_parallel = _is_v7x()
    # v7x: 2 TensorCores, each with its own DMA path to HBM -> shard batch
    # blocks across cores.  On 1-TC chips (v5e/v6e) keep plain "parallel".
    batch_sem = (pltpu.CORE_PARALLEL
                 if (core_parallel and num_blocks >= 2) else "parallel")

    partial_sums = pl.pallas_call(
        kernel,
        out_shape=jax.ShapeDtypeStruct((num_blocks, _SUBLANES, _LANES),
                                       jnp.float32),
        grid_spec=pltpu.PrefetchScalarGridSpec(
            num_scalar_prefetch=0,
            grid=(num_blocks,),
            in_specs=[make_in_spec(), make_in_spec(), make_in_spec()],
            out_specs=pl.BlockSpec((1, _SUBLANES, _LANES), lambda b: (b, 0, 0)),
        ),
        compiler_params=pltpu.CompilerParams(
            dimension_semantics=(batch_sem,),
            vmem_limit_bytes=int(vmem_limit),
        ),
    )(anchor, positive, negative)

    # Sum of per-block partial sums / B == mean over rows.
    return jnp.sum(partial_sums[:, 0, 0]) / jnp.float32(B)


# ----------------------------------------------------------------------------
# Pure-JAX reference (mirrors the PyTorch module exactly)
# ----------------------------------------------------------------------------
def _reference(anchor, positive, negative):
    def l2n(x):
        x = x.astype(jnp.float32)
        nrm = jnp.linalg.norm(x, axis=1, keepdims=True)
        return x / jnp.maximum(nrm, EPS)

    a, p, n = l2n(anchor), l2n(positive), l2n(negative)
    pos_dist = jnp.sum((a - p) ** 2, axis=1)
    neg_dist = jnp.sum((a - n) ** 2, axis=1)
    return jnp.mean(jnp.maximum(pos_dist - neg_dist + MARGIN, 0.0))


if __name__ == "__main__":
    key = jax.random.PRNGKey(0)
    k1, k2, k3 = jax.random.split(key, 3)

    # 1) Small single-block case (B=8, D=32), f32 -> exact path.
    B, D = 8, 32
    a = jax.random.normal(k1, (B, D), dtype=jnp.float32)
    p = jax.random.normal(k2, (B, D), dtype=jnp.float32)
    n = jax.random.normal(k3, (B, D), dtype=jnp.float32)
    out = triplet_loss(a, p, n)
    jax.block_until_ready(out)
    ref = _reference(a, p, n)
    assert jnp.allclose(out, ref, atol=1e-5, rtol=1e-5), (out, ref)

    # 2) Multi-block with a partial (masked) last block.
    B2, D2 = 50, 32
    a2 = jax.random.normal(k1, (B2, D2), dtype=jnp.float32)
    p2 = jax.random.normal(k2, (B2, D2), dtype=jnp.float32)
    n2 = jax.random.normal(k3, (B2, D2), dtype=jnp.float32)
    out2 = triplet_loss(a2, p2, n2, block_rows=16)
    jax.block_until_ready(out2)
    ref2 = _reference(a2, p2, n2)
    assert jnp.allclose(out2, ref2, atol=1e-5, rtol=1e-5), (out2, ref2)

    # 3) Wide rows -> exercises the chunked fori_loop (+ lane remainder) path.
    B3, D3 = 24, 1152  # 2 full 512-lane chunks + a 128-lane tail
    a3 = jax.random.normal(k1, (B3, D3), dtype=jnp.float32)
    p3 = jax.random.normal(k2, (B3, D3), dtype=jnp.float32)
    n3 = jax.random.normal(k3, (B3, D3), dtype=jnp.float32)
    out3 = triplet_loss(a3, p3, n3)
    jax.block_until_ready(out3)
    ref3 = _reference(a3, p3, n3)
    assert jnp.allclose(out3, ref3, atol=1e-5, rtol=1e-5), (out3, ref3)

    # 4) bf16 ingest path (native bf16 products, f32 accumulation).
    B4, D4 = 16, 256
    a4 = jax.random.normal(k1, (B4, D4), dtype=jnp.bfloat16)
    p4 = jax.random.normal(k2, (B4, D4), dtype=jnp.bfloat16)
    n4 = jax.random.normal(k3, (B4, D4), dtype=jnp.bfloat16)
    out4 = triplet_loss(a4, p4, n4)
    jax.block_until_ready(out4)
    ref4 = _reference(a4, p4, n4)
    assert jnp.allclose(out4, ref4, atol=5e-2, rtol=5e-2), (out4, ref4)

    print("KERNEL_OK")
</pallas_src>

<mosaic_0001>
module attributes {stable_mosaic.version = 11 : i64} {
  func.func @_triplet_loss_kernel(%arg0: i32, %arg1: memref<8x32xf32, #tpu.memory_space<vmem>>, %arg2: memref<8x32xf32, #tpu.memory_space<vmem>>, %arg3: memref<8x32xf32, #tpu.memory_space<vmem>>, %arg4: memref<1x8x128xf32, #tpu.memory_space<vmem>>) attributes {dimension_semantics = [#tpu.dimension_semantics<parallel>], iteration_bounds = array<i64: 1>, scalar_prefetch = 0 : i64, scratch_operands = 0 : i64, tpu.core_type = #tpu.core_type<tc>, window_params = [{transform_indices = @transform_0, window_bounds = array<i64: 8, 32>}, {transform_indices = @transform_1, window_bounds = array<i64: 8, 32>}, {transform_indices = @transform_2, window_bounds = array<i64: 8, 32>}, {transform_indices = @transform_3, window_bounds = array<i64: 1, 8, 128>}]} {
    %c0 = arith.constant 0 : index
    %c0_0 = arith.constant 0 : index
    %0 = vector.load %arg1[%c0, %c0_0] : memref<8x32xf32, #tpu.memory_space<vmem>>, vector<8x32xf32>
    %c0_1 = arith.constant 0 : index
    %c0_2 = arith.constant 0 : index
    %1 = vector.load %arg2[%c0_1, %c0_2] : memref<8x32xf32, #tpu.memory_space<vmem>>, vector<8x32xf32>
    %c0_3 = arith.constant 0 : index
    %c0_4 = arith.constant 0 : index
    %2 = vector.load %arg3[%c0_3, %c0_4] : memref<8x32xf32, #tpu.memory_space<vmem>>, vector<8x32xf32>
    %3 = arith.mulf %0, %0 : vector<8x32xf32>
    %cst = arith.constant dense<0.000000e+00> : vector<8xf32>
    %4 = vector.multi_reduction <add>, %3, %cst [1] : vector<8x32xf32> to vector<8xf32>
    %5 = vector.shape_cast %4 : vector<8xf32> to vector<8x1xf32>
    %6 = arith.mulf %1, %1 : vector<8x32xf32>
    %cst_5 = arith.constant dense<0.000000e+00> : vector<8xf32>
    %7 = vector.multi_reduction <add>, %6, %cst_5 [1] : vector<8x32xf32> to vector<8xf32>
    %8 = vector.shape_cast %7 : vector<8xf32> to vector<8x1xf32>
    %9 = arith.mulf %2, %2 : vector<8x32xf32>
    %cst_6 = arith.constant dense<0.000000e+00> : vector<8xf32>
    %10 = vector.multi_reduction <add>, %9, %cst_6 [1] : vector<8x32xf32> to vector<8xf32>
    %11 = vector.shape_cast %10 : vector<8xf32> to vector<8x1xf32>
    %12 = arith.mulf %0, %1 : vector<8x32xf32>
    %cst_7 = arith.constant dense<0.000000e+00> : vector<8xf32>
    %13 = vector.multi_reduction <add>, %12, %cst_7 [1] : vector<8x32xf32> to vector<8xf32>
    %14 = vector.shape_cast %13 : vector<8xf32> to vector<8x1xf32>
    %15 = arith.mulf %0, %2 : vector<8x32xf32>
    %cst_8 = arith.constant dense<0.000000e+00> : vector<8xf32>
    %16 = vector.multi_reduction <add>, %15, %cst_8 [1] : vector<8x32xf32> to vector<8xf32>
    %17 = vector.shape_cast %16 : vector<8xf32> to vector<8x1xf32>
    %cst_9 = arith.constant 1.000000e-24 : f32
    %18 = vector.broadcast %cst_9 : f32 to vector<8x1xf32>
    %19 = arith.maximumf %5, %18 : vector<8x1xf32>
    %20 = math.rsqrt %19 : vector<8x1xf32>
    %cst_10 = arith.constant 1.000000e-24 : f32
    %21 = vector.broadcast %cst_10 : f32 to vector<8x1xf32>
    %22 = arith.maximumf %8, %21 : vector<8x1xf32>
    %23 = math.rsqrt %22 : vector<8x1xf32>
    %cst_11 = arith.constant 1.000000e-24 : f32
    %24 = vector.broadcast %cst_11 : f32 to vector<8x1xf32>
    %25 = arith.maximumf %11, %24 : vector<8x1xf32>
    %26 = math.rsqrt %25 : vector<8x1xf32>
    %27 = arith.mulf %20, %20 : vector<8x1xf32>
    %28 = arith.mulf %5, %27 : vector<8x1xf32>
    %29 = arith.mulf %23, %23 : vector<8x1xf32>
    %30 = arith.mulf %8, %29 : vector<8x1xf32>
    %31 = arith.mulf %26, %26 : vector<8x1xf32>
    %32 = arith.mulf %11, %31 : vector<8x1xf32>
    %33 = arith.addf %28, %30 : vector<8x1xf32>
    %cst_12 = arith.constant 2.000000e+00 : f32
    %34 = vector.broadcast %cst_12 : f32 to vector<8x1xf32>
    %35 = arith.mulf %34, %14 : vector<8x1xf32>
    %36 = arith.mulf %20, %23 : vector<8x1xf32>
    %37 = arith.mulf %35, %36 : vector<8x1xf32>
    %38 = arith.subf %33, %37 : vector<8x1xf32>
    %cst_13 = arith.constant 0.000000e+00 : f32
    %39 = vector.broadcast %cst_13 : f32 to vector<8x1xf32>
    %40 = arith.maximumf %38, %39 : vector<8x1xf32>
    %41 = arith.addf %28, %32 : vector<8x1xf32>
    %cst_14 = arith.constant 2.000000e+00 : f32
    %42 = vector.broadcast %cst_14 : f32 to vector<8x1xf32>
    %43 = arith.mulf %42, %17 : vector<8x1xf32>
    %44 = arith.mulf %20, %26 : vector<8x1xf32>
    %45 = arith.mulf %43, %44 : vector<8x1xf32>
    %46 = arith.subf %41, %45 : vector<8x1xf32>
    %cst_15 = arith.constant 0.000000e+00 : f32
    %47 = vector.broadcast %cst_15 : f32 to vector<8x1xf32>
    %48 = arith.maximumf %46, %47 : vector<8x1xf32>
    %49 = arith.subf %40, %48 : vector<8x1xf32>
    %cst_16 = arith.constant 5.000000e-01 : f32
    %50 = vector.broadcast %cst_16 : f32 to vector<8x1xf32>
    %51 = arith.addf %49, %50 : vector<8x1xf32>
    %cst_17 = arith.constant 0.000000e+00 : f32
    %52 = vector.broadcast %cst_17 : f32 to vector<8x1xf32>
    %53 = arith.maximumf %51, %52 : vector<8x1xf32>
    %54 = vector.shape_cast %53 : vector<8x1xf32> to vector<1x8x1xf32>
    %cst_18 = arith.constant dense<0.000000e+00> : vector<1xf32>
    %55 = vector.multi_reduction <add>, %54, %cst_18 [1, 2] : vector<1x8x1xf32> to vector<1xf32>
    %56 = vector.shape_cast %55 : vector<1xf32> to vector<1x1x1xf32>
    %57 = vector.extract %56[0, 0, 0] : f32 from vector<1x1x1xf32>
    %58 = vector.broadcast %57 : f32 to vector<1x8x128xf32>
    %c0_19 = arith.constant 0 : index
    %c0_20 = arith.constant 0 : index
    %c0_21 = arith.constant 0 : index
    %59 = vector.load %arg4[%c0_19, %c0_20, %c0_21] : memref<1x8x128xf32, #tpu.memory_space<vmem>>, vector<1x8x128xf32>
    tpu.vector_store %arg4[%c0_19, %c0_20, %c0_21], %58 {strides = array<i32>} : memref<1x8x128xf32, #tpu.memory_space<vmem>>, vector<1x8x128xf32>,
    return
  }
  func.func @transform_0(%arg0: i32) -> (i32, i32) {
    %c0_i32 = arith.constant 0 : i32
    %c0_i32_0 = arith.constant 0 : i32
    return %arg0, %c0_i32 : i32, i32
  }
  func.func @transform_1(%arg0: i32) -> (i32, i32) {
    %c0_i32 = arith.constant 0 : i32
    %c0_i32_0 = arith.constant 0 : i32
    return %arg0, %c0_i32 : i32, i32
  }
  func.func @transform_2(%arg0: i32) -> (i32, i32) {
    %c0_i32 = arith.constant 0 : i32
    %c0_i32_0 = arith.constant 0 : i32
    return %arg0, %c0_i32 : i32, i32
  }
  func.func @transform_3(%arg0: i32) -> (i32, i32, i32) {
    %c0_i32 = arith.constant 0 : i32
    %c0_i32_0 = arith.constant 0 : i32
    %c0_i32_1 = arith.constant 0 : i32
    return %arg0, %c0_i32, %c0_i32_0 : i32, i32, i32
  }
}

</mosaic_0001>

<llo_original>
// kernel: tpu_custom_call.1
$region0: #{tpu_custom_call.1}
  #allocation0 [shape = 'u32[]', space=smem, size = 0x4, offset = 0x4, fixed_abs, tag = 'smem constant byte address 0x4 - core index']
  #allocation1 [shape = 'u32[144,128]{1,0:T(1,128)}', space=vmem, size = 0x12000, scoped, tag = 'internal scratch']
  %s0 = inlined_call_operand.hbm [shape: f32[8,32], index: 0, kind: input, shape index: {}]
  %s1 = inlined_call_operand.hbm [shape: f32[8,32], index: 1, kind: input, shape index: {}]
  %s2 = inlined_call_operand.hbm [shape: f32[8,32], index: 2, kind: input, shape index: {}]
  %s3 = inlined_call_operand.hbm [shape: f32[1,8,128], index: 3, kind: output, shape index: {}]
  %s4 = sld [smem:[#allocation0]]
  $region34: #{tpu_custom_call.1} parent=0
    _
  %s6 = ssub.s32 1, %s4
  %s7 = scalar_select 0, %s6, %s4
  $region1: #{tpu_custom_call.1} parent=0
    #allocation2 [shape = 'u8[4096]{0}', space=vmem, size = 0x1000, scoped, tag = 'input window, operand 0, single buffered']
    #allocation3 [shape = 's32[1]{0}', space=sflag, size = 0x4, scoped, tag = 'scoped memory for tpu_custom_call.1']
    #allocation4 [shape = 's32[1]{0}', space=sflag, size = 0x4, scoped, tag = 'scoped memory for tpu_custom_call.1']
    #allocation5 [shape = 'u8[4096]{0}', space=vmem, size = 0x1000, scoped, tag = 'input window, operand 1, single buffered']
    #allocation6 [shape = 's32[1]{0}', space=sflag, size = 0x4, scoped, tag = 'scoped memory for tpu_custom_call.1']
    #allocation7 [shape = 'u8[4096]{0}', space=vmem, size = 0x1000, scoped, tag = 'input window, operand 2, single buffered']
    #allocation8 [shape = 'u8[4096]{0}', space=vmem, size = 0x1000, scoped, tag = 'output window, operand 0, single buffered']
    %8 = vsyncpa [#allocation3], 0
    %9 = vsyncpa [#allocation6], 0
    %10 = vsyncpa [#allocation4], 0
    // Predicated region
    $region2: #{tpu_custom_call.1} parent=1 // pred_check
      _
    $region3: #{tpu_custom_call.1} parent=1 // pred_check_branch
      %12 = sbr.rel (0) target = $region5
    $region4: #{tpu_custom_call.1} parent=1 // pred_region
      %s14 = ssub.s32 128, 128
      %15 = vsyncadd [#allocation3], %s14
      %s17 = sshll.u32 [#allocation2], 4
      %s18 = int_to_ptr.vmem [resolvable:$true] %s17
      %20 = dma.hbm_to_vmem [thread:$0]  %s0, 128, %s18, [#allocation3]
    $region5: #{tpu_custom_call.1} parent=1 // pred_fallthru
      _
    // Predicated region
    $region6: #{tpu_custom_call.1} parent=1 // pred_check
      _
    $region7: #{tpu_custom_call.1} parent=1 // pred_check_branch
      %22 = sbr.rel (0) target = $region9
    $region8: #{tpu_custom_call.1} parent=1 // pred_region
      %s24 = ssub.s32 128, 128
      %25 = vsyncadd [#allocation6], %s24
      %s27 = sshll.u32 [#allocation5], 4
      %s28 = int_to_ptr.vmem [resolvable:$true] %s27
      %30 = dma.hbm_to_vmem [thread:$0]  %s1, 128, %s28, [#allocation6]
    $region9: #{tpu_custom_call.1} parent=1 // pred_fallthru
      _
    // Predicated region
    $region10: #{tpu_custom_call.1} parent=1 // pred_check
      _
    $region11: #{tpu_custom_call.1} parent=1 // pred_check_branch
      %32 = sbr.rel (0) target = $region13
    $region12: #{tpu_custom_call.1} parent=1 // pred_region
      %s34 = ssub.s32 128, 128
      %35 = vsyncadd [#allocation6], %s34
      %s37 = sshll.u32 [#allocation7], 4
      %s38 = int_to_ptr.vmem [resolvable:$true] %s37
      %40 = dma.hbm_to_vmem [thread:$0]  %s2, 128, %s38, [#allocation6]
    $region13: #{tpu_custom_call.1} parent=1 // pred_fallthru
      _
    // Predicated region
    $region14: #{tpu_custom_call.1} parent=1 // pred_check
      _
    $region15: #{tpu_custom_call.1} parent=1 // pred_check_branch
      %42 = sbr.rel (0) target = $region17
    $region16: #{tpu_custom_call.1} parent=1 // pred_region
      %43 = dma.done [#allocation3], 128
    $region17: #{tpu_custom_call.1} parent=1 // pred_fallthru
      _
    // Predicated region
    $region18: #{tpu_custom_call.1} parent=1 // pred_check
      _
    $region19: #{tpu_custom_call.1} parent=1 // pred_check_branch
      %45 = sbr.rel (0) target = $region21
    $region20: #{tpu_custom_call.1} parent=1 // pred_region
      %46 = dma.done [#allocation6], 128
    $region21: #{tpu_custom_call.1} parent=1 // pred_fallthru
      _
    // Predicated region
    $region22: #{tpu_custom_call.1} parent=1 // pred_check
      _
    $region23: #{tpu_custom_call.1} parent=1 // pred_check_branch
      %48 = sbr.rel (0) target = $region25
    $region24: #{tpu_custom_call.1} parent=1 // pred_region
      %49 = dma.done [#allocation6], 128
    $region25: #{tpu_custom_call.1} parent=1 // pred_fallthru
      _
    %v50 = vld [vmem:[#allocation2] sm:$0xff]
    %v51 = vld [vmem:[#allocation5] sm:$0xff]
    %v52 = vld [vmem:[#allocation7] sm:$0xff]
    %v53 = vmul.f32 %v50, %v50
    %vm54 = vcmask 261120
    %v55 = vsel %vm54, %v53, 0.0
    %56 = vadd.xlane.f32.xlu0 %v55
    %v57 = vpop.xlane.xlu0 %56
    %v58 = vmul.f32 %v51, %v51
    %v59 = vsel %vm54, %v58, 0.0
    %60 = vadd.xlane.f32.xlu0 %v59
    %v61 = vpop.xlane.xlu0 %60
    %v62 = vmul.f32 %v52, %v52
    %v63 = vsel %vm54, %v62, 0.0
    %64 = vadd.xlane.f32.xlu0 %v63
    %v65 = vpop.xlane.xlu0 %64
    %v66 = vmul.f32 %v50, %v51
    %v67 = vsel %vm54, %v66, 0.0
    %68 = vadd.xlane.f32.xlu0 %v67
    %v69 = vpop.xlane.xlu0 %68
    %v70 = vmul.f32 %v50, %v52
    %v71 = vsel %vm54, %v70, 0.0
    %72 = vadd.xlane.f32.xlu0 %v71
    %v73 = vpop.xlane.xlu0 %72
    %v74 = vmax.f32 %v57, 1e-24
    %v75 = vrsqrt.pop %v74
    %v76 = vmax.f32 %v61, 1e-24
    %v77 = vrsqrt.pop %v76
    %v78 = vmax.f32 %v65, 1e-24
    %v79 = vrsqrt.pop %v78
    %v80 = vmul.f32 %v75, %v75
    %v81 = vmul.f32 %v57, %v80
    %v82 = vmul.f32 %v77, %v77
    %v83 = vmul.f32 %v61, %v82
    %v84 = vmul.f32 %v79, %v79
    %v85 = vmul.f32 %v65, %v84
    %v86 = vadd.f32 %v81, %v83
    %v87 = vmul.f32 %v69, 2.0
    %v88 = vmul.f32 %v75, %v77
    %v89 = vmul.f32 %v87, %v88
    %v90 = vsub.f32 %v86, %v89
    %v91 = vmax.f32 %v90, 0.0
    %v92 = vadd.f32 %v81, %v85
    %v93 = vmul.f32 %v73, 2.0
    %v94 = vmul.f32 %v75, %v79
    %v95 = vmul.f32 %v93, %v94
    %v96 = vsub.f32 %v92, %v95
    %v97 = vmax.f32 %v96, 0.0
    %v98 = vsub.f32 %v91, %v97
    %v99 = vadd.f32 %v98, 0.5
    %v100 = vmax.f32 %v99, 0.0
    %vm101 = vcmask 7168
    %v102 = vsel %vm101, %v100, 0.0
    %103 = vadd.xlane.f32.xlu0 %v102
    %v104 = vpop.xlane.xlu0 %103
    %v105 = vrot.slane %v104, 4
    %v106 = vadd.f32 %v104, %v105
    %v107 = vrot.slane %v106, 2
    %v108 = vadd.f32 %v106, %v107
    %v109 = vrot.slane %v108, 1
    %v110 = vadd.f32 %v108, %v109
    %s111 = vtos %v110
    %v112 = vstv %s111
    %113 = vst [vmem:[#allocation8] sm:$0xff] %v112
    // Predicated region
    $region26: #{tpu_custom_call.1} parent=1 // pred_check
      _
    $region27: #{tpu_custom_call.1} parent=1 // pred_check_branch
      %115 = sbr.rel (0) target = $region29
    $region28: #{tpu_custom_call.1} parent=1 // pred_region
      %s117 = ssub.s32 128, 128
      %118 = vsyncadd [#allocation4], %s117
      %s120 = sshll.u32 [#allocation8], 4
      %s121 = int_to_ptr.vmem [resolvable:$true] %s120
      %123 = dma.vmem_to_hbm [thread:$0]  %s121, 128, %s3, [#allocation4]
    $region29: #{tpu_custom_call.1} parent=1 // pred_fallthru
      _
    // Predicated region
    $region30: #{tpu_custom_call.1} parent=1 // pred_check
      _
    $region31: #{tpu_custom_call.1} parent=1 // pred_check_branch
      %125 = sbr.rel (0) target = $region33
    $region32: #{tpu_custom_call.1} parent=1 // pred_region
      %126 = dma.done [#allocation4], 128
    $region33: #{tpu_custom_call.1} parent=1 // pred_fallthru
      _
    %127 = vsyncpa [#allocation3], 1
    %128 = vsyncpa [#allocation6], 1
    %129 = vsyncpa [#allocation4], 1

</llo_original>
